<compile_context>
chip_gen: v7x
topology: tpu7x:2x2x1
jax: 0.10.0
libtpu: 0.0.40
codegen_flags: <defaults>
</compile_context>

<pallas_src>
import jax
import jax.numpy as jnp
from jax import lax
from jax.experimental import pallas as pl
from jax.experimental.pallas import tpu as pltpu


def _inner_product_decoder_kernel(zi_ref, zj_ref, a_ref, acc_ref):
    """One (tm, tn) tile of A[b] = sigmoid(z[b] @ z[b]^T), K-tiled.

    zi_ref : (tm, tk) row block of z[b]
    zj_ref : (tn, tk) column block of z[b]
    a_ref  : (tm, tn) output tile (resident across the innermost k axis)
    acc_ref: (tm, tn) f32 accumulator scratch
    """
    k = pl.program_id(3)

    @pl.when(k == 0)
    def _():
        acc_ref[...] = jnp.zeros_like(acc_ref)

    # Transposed-RHS contraction of the channel dims: no in-kernel transpose,
    # the MXU is fed directly, accumulation stays f32.
    acc_ref[...] += lax.dot_general(
        zi_ref[...],
        zj_ref[...],
        dimension_numbers=(((1,), (1,)), ((), ())),
        preferred_element_type=jnp.float32,
    )

    @pl.when(k == pl.num_programs(3) - 1)
    def _():
        # sigmoid(x) == 0.5 * tanh(0.5 * x) + 0.5 : a single EUP push per
        # element (vs exp + divide), keeping the EUP slot off the critical
        # path when the kernel is HBM-write-bound.
        a_ref[...] = (0.5 * jnp.tanh(0.5 * acc_ref[...]) + 0.5).astype(a_ref.dtype)


def _round_up(x: int, m: int) -> int:
    return ((x + m - 1) // m) * m


def _vmem_capacity_bytes() -> int:
    try:
        return int(pltpu.get_tpu_info().vmem_capacity_bytes)
    except Exception:
        return 64 * 1024 * 1024  # conservative: v7x per-TensorCore VMEM


def _vmem_footprint_bytes(tm, tn, tk, op_itemsize, out_itemsize) -> int:
    # Double-buffered operands + double-buffered output tile + f32 accumulator.
    return (2 * (tm + tn) * tk * op_itemsize
            + 2 * tm * tn * out_itemsize
            + tm * tn * 4)


def _pick_tiles(u_pad, c_pad, op_itemsize, out_itemsize, budget):
    # Channel tile: full C when small, otherwise the largest 128-multiple
    # divisor (c_pad has already been padded so one exists).
    if c_pad <= 2048:
        tk = c_pad
    else:
        tk = max(t for t in (2048, 1024, 512, 256, 128) if c_pad % t == 0)
    # Output tiles: the biggest MXU-aligned tile whose footprint fits VMEM.
    cands = [t for t in (512, 256, 128) if u_pad % t == 0]
    tm = cands[-1]
    for t in cands:
        if _vmem_footprint_bytes(t, t, tk, op_itemsize, out_itemsize) <= budget:
            tm = t
            break
    return tm, tm, tk


def inner_product_decoder(z, dropout: float = 0.0, training: bool = False,
                          *, out_dtype=None, use_bf16_matmul: bool = True):
    """A = sigmoid(z @ z^T), batched over the leading dim. z: (N, U, C)."""
    # TODO(synk): dropout is identity here (p=0.0 / eval mode); stochastic
    # dropout would use pltpu.prng_seed / pltpu.prng_random_bits if needed.
    del dropout, training

    n, u, c = z.shape
    out_dtype = jnp.dtype(out_dtype) if out_dtype is not None else z.dtype

    # Cast matmul operands to bf16 once in the wrapper: bf16 MXU path on
    # v6e/v7x plus halved operand DMA bytes; accumulation stays f32 in-kernel.
    zc = z
    if use_bf16_matmul and z.dtype == jnp.float32:
        zc = z.astype(jnp.bfloat16)
    op_itemsize = jnp.dtype(zc.dtype).itemsize
    out_itemsize = jnp.dtype(out_dtype).itemsize

    # Pad U (and C if it has no 128-multiple divisor when tiled) up to
    # lane-friendly multiples. Padded rows are zeros (contribute nothing to
    # the contraction) and the padded output region is sliced away.
    u_pad = _round_up(u, 128)
    c_pad = c
    if c > 2048 and all(c % t for t in (2048, 1024, 512, 256, 128)):
        c_pad = _round_up(c, 512)
    if (u_pad, c_pad) != (u, c):
        zc = jnp.pad(zc, ((0, 0), (0, u_pad - u), (0, c_pad - c)))

    capacity = _vmem_capacity_bytes()
    tile_budget = int(capacity * 0.55)
    tm, tn, tk = _pick_tiles(u_pad, c_pad, op_itemsize, out_itemsize, tile_budget)
    footprint = _vmem_footprint_bytes(tm, tn, tk, op_itemsize, out_itemsize)
    # footprint already includes double buffering; add ~30% + 4 MiB headroom
    # for compiler scratch and clamp below physical VMEM of this generation
    # (~100 MiB on 128 MiB parts, ~50 MiB on v7x's 64 MiB).
    vmem_limit = int(min(max(int(footprint * 1.3) + (4 << 20), 32 << 20),
                         int(capacity * 0.78)))

    # Row-tile axis leads so megacore sharding splits a multi-extent axis even
    # when N is 1 or odd; channel contraction (k) is innermost.
    grid = (u_pad // tm, n, u_pad // tn, c_pad // tk)

    # TODO(synk): exploit A's symmetry (compute only j >= i tiles and write the
    # transposed tile to (j, i)) to halve MXU work in the compute-bound regime.
    a = pl.pallas_call(
        _inner_product_decoder_kernel,
        out_shape=jax.ShapeDtypeStruct((n, u_pad, u_pad), out_dtype),
        grid_spec=pltpu.PrefetchScalarGridSpec(
            num_scalar_prefetch=0,
            grid=grid,
            in_specs=[
                # Row operand block of z[b].
                pl.BlockSpec((pl.Squeezed(), tm, tk),
                             lambda i, b, j, k: (b, i, k)),
                # Column operand block of z[b].
                pl.BlockSpec((pl.Squeezed(), tn, tk),
                             lambda i, b, j, k: (b, j, k)),
            ],
            out_specs=pl.BlockSpec((pl.Squeezed(), tm, tn),
                                   lambda i, b, j, k: (b, i, j)),
            scratch_shapes=[pltpu.VMEM((tm, tn), jnp.float32)],
        ),
        compiler_params=pltpu.CompilerParams(
            dimension_semantics=("parallel", "parallel", "parallel", "arbitrary"),
            vmem_limit_bytes=vmem_limit,
        ),
    )(zc, zc)

    if u_pad != u:
        a = a[:, :u, :u]
    return a


if __name__ == "__main__":
    def reference(z):
        # Reference with the same bf16 operand rounding the kernel uses.
        zb = z.astype(jnp.bfloat16).astype(jnp.float32)
        return jax.nn.sigmoid(jnp.einsum("nuc,nvc->nuv", zb, zb))

    # Small shape implied by the module's forward: batch=2, nodes=8, hidden=32.
    N, U, C = 2, 8, 32
    z_small = jax.random.normal(jax.random.PRNGKey(0), (N, U, C), jnp.float32)
    a_small = jax.block_until_ready(inner_product_decoder(z_small))
    assert a_small.shape == (N, U, U)
    assert jnp.allclose(a_small, reference(z_small), atol=2e-3, rtol=2e-3)

    # 128-aligned multi-tile path (3x3 output tiles per batch element).
    z_big = jax.random.normal(jax.random.PRNGKey(1), (2, 384, 64), jnp.float32)
    a_big = jax.block_until_ready(inner_product_decoder(z_big))
    assert a_big.shape == (2, 384, 384)
    assert jnp.allclose(a_big, reference(z_big), atol=2e-3, rtol=2e-3)

    # Non-128-multiple U exercises the pad-and-slice path.
    z_odd = jax.random.normal(jax.random.PRNGKey(2), (2, 200, 48), jnp.float32)
    a_odd = jax.block_until_ready(inner_product_decoder(z_odd))
    assert a_odd.shape == (2, 200, 200)
    assert jnp.allclose(a_odd, reference(z_odd), atol=2e-3, rtol=2e-3)

    print("KERNEL_OK")
</pallas_src>

<mosaic_0001>
module attributes {stable_mosaic.version = 11 : i64} {
  func.func @_inner_product_decoder_kernel(%arg0: i32, %arg1: i32, %arg2: i32, %arg3: i32, %arg4: memref<1x128x32xbf16, #tpu.memory_space<vmem>>, %arg5: memref<1x128x32xbf16, #tpu.memory_space<vmem>>, %arg6: memref<1x128x128xf32, #tpu.memory_space<vmem>>, %arg7: memref<128x128xf32, #tpu.memory_space<vmem>>) attributes {dimension_semantics = [#tpu.dimension_semantics<parallel>, #tpu.dimension_semantics<parallel>, #tpu.dimension_semantics<parallel>, #tpu.dimension_semantics<arbitrary>], iteration_bounds = array<i64: 1, 2, 1, 1>, scalar_prefetch = 0 : i64, scratch_operands = 1 : i64, tpu.core_type = #tpu.core_type<tc>, window_params = [{transform_indices = @transform_0, window_bounds = array<i64: 1, 128, 32>}, {transform_indices = @transform_1, window_bounds = array<i64: 1, 128, 32>}, {transform_indices = @transform_2, window_bounds = array<i64: 1, 128, 128>}]} {
    %c0_i32 = arith.constant 0 : i32
    %0 = arith.cmpi eq, %arg3, %c0_i32 : i32
    %1 = arith.extui %0 : i1 to i32
    %c0_i32_0 = arith.constant 0 : i32
    %2 = arith.cmpi ne, %1, %c0_i32_0 : i32
    scf.if %2 {
      %cst_12 = arith.constant 0.000000e+00 : f32
      %14 = vector.broadcast %cst_12 : f32 to vector<128x128xf32>
      %c0_13 = arith.constant 0 : index
      %c0_14 = arith.constant 0 : index
      %15 = vector.load %arg7[%c0_13, %c0_14] : memref<128x128xf32, #tpu.memory_space<vmem>>, vector<128x128xf32>
      tpu.vector_store %arg7[%c0_13, %c0_14], %14 {strides = array<i32>} : memref<128x128xf32, #tpu.memory_space<vmem>>, vector<128x128xf32>,
    } else {
    }
    %c0 = arith.constant 0 : index
    %c0_1 = arith.constant 0 : index
    %3 = vector.load %arg7[%c0, %c0_1] : memref<128x128xf32, #tpu.memory_space<vmem>>, vector<128x128xf32>
    %c0_2 = arith.constant 0 : index
    %c0_3 = arith.constant 0 : index
    %c0_4 = arith.constant 0 : index
    %4 = vector.load %arg4[%c0_2, %c0_3, %c0_4] : memref<1x128x32xbf16, #tpu.memory_space<vmem>>, vector<1x128x32xbf16>
    %5 = vector.shape_cast %4 : vector<1x128x32xbf16> to vector<128x32xbf16>
    %c0_5 = arith.constant 0 : index
    %c0_6 = arith.constant 0 : index
    %c0_7 = arith.constant 0 : index
    %6 = vector.load %arg5[%c0_5, %c0_6, %c0_7] : memref<1x128x32xbf16, #tpu.memory_space<vmem>>, vector<1x128x32xbf16>
    %7 = vector.shape_cast %6 : vector<1x128x32xbf16> to vector<128x32xbf16>
    %cst = arith.constant dense<0.000000e+00> : vector<128x128xf32>
    %8 = tpu.matmul %5, %7, %cst {dimension_numbers = #tpu.dot_dimension_numbers<[1], [1], [0], [0], [0, 0, 1, 0], [], []>} : vector<128x32xbf16>, vector<128x32xbf16>, vector<128x128xf32> -> vector<128x128xf32>
    %9 = arith.addf %3, %8 : vector<128x128xf32>
    %c0_8 = arith.constant 0 : index
    %c0_9 = arith.constant 0 : index
    %10 = vector.load %arg7[%c0_8, %c0_9] : memref<128x128xf32, #tpu.memory_space<vmem>>, vector<128x128xf32>
    tpu.vector_store %arg7[%c0_8, %c0_9], %9 {strides = array<i32>} : memref<128x128xf32, #tpu.memory_space<vmem>>, vector<128x128xf32>,
    %c0_i32_10 = arith.constant 0 : i32
    %11 = arith.cmpi eq, %arg3, %c0_i32_10 : i32
    %12 = arith.extui %11 : i1 to i32
    %c0_i32_11 = arith.constant 0 : i32
    %13 = arith.cmpi ne, %12, %c0_i32_11 : i32
    scf.if %13 {
      %c0_12 = arith.constant 0 : index
      %c0_13 = arith.constant 0 : index
      %14 = vector.load %arg7[%c0_12, %c0_13] : memref<128x128xf32, #tpu.memory_space<vmem>>, vector<128x128xf32>
      %cst_14 = arith.constant 5.000000e-01 : f32
      %15 = vector.broadcast %cst_14 : f32 to vector<128x128xf32>
      %16 = arith.mulf %15, %14 : vector<128x128xf32>
      %17 = math.tanh %16 : vector<128x128xf32>
      %cst_15 = arith.constant 5.000000e-01 : f32
      %18 = vector.broadcast %cst_15 : f32 to vector<128x128xf32>
      %19 = arith.mulf %18, %17 : vector<128x128xf32>
      %cst_16 = arith.constant 5.000000e-01 : f32
      %20 = vector.broadcast %cst_16 : f32 to vector<128x128xf32>
      %21 = arith.addf %19, %20 : vector<128x128xf32>
      %c0_17 = arith.constant 0 : index
      %c0_18 = arith.constant 0 : index
      %c0_19 = arith.constant 0 : index
      %22 = vector.load %arg6[%c0_17, %c0_18, %c0_19] : memref<1x128x128xf32, #tpu.memory_space<vmem>>, vector<1x128x128xf32>
      %23 = vector.shape_cast %22 : vector<1x128x128xf32> to vector<128x128xf32>
      %24 = vector.shape_cast %21 : vector<128x128xf32> to vector<1x128x128xf32>
      tpu.vector_store %arg6[%c0_17, %c0_18, %c0_19], %24 {strides = array<i32>} : memref<1x128x128xf32, #tpu.memory_space<vmem>>, vector<1x128x128xf32>,
    } else {
    }
    return
  }
  func.func @transform_0(%arg0: i32, %arg1: i32, %arg2: i32, %arg3: i32) -> (i32, i32, i32) {
    %c0_i32 = arith.constant 0 : i32
    return %arg1, %arg0, %arg3 : i32, i32, i32
  }
  func.func @transform_1(%arg0: i32, %arg1: i32, %arg2: i32, %arg3: i32) -> (i32, i32, i32) {
    %c0_i32 = arith.constant 0 : i32
    return %arg1, %arg2, %arg3 : i32, i32, i32
  }
  func.func @transform_2(%arg0: i32, %arg1: i32, %arg2: i32, %arg3: i32) -> (i32, i32, i32) {
    %c0_i32 = arith.constant 0 : i32
    return %arg1, %arg0, %arg2 : i32, i32, i32
  }
}

</mosaic_0001>

<llo_original>
// kernel: tpu_custom_call.1
$region0: #{tpu_custom_call.1}
  #allocation0 [shape = 'u32[]', space=smem, size = 0x4, offset = 0x4, fixed_abs, tag = 'smem constant byte address 0x4 - core index']
  #allocation1 [shape = 'u32[144,128]{1,0:T(1,128)}', space=vmem, size = 0x12000, scoped, tag = 'internal scratch']
  #allocation2 [shape = 'f32[128,128]{1,0:T(8,128)}', space=vmem, size = 0x10000, scoped, tag = 'scratch operand']
  %s0 = inlined_call_operand.vmem [shape: bf16[2,128,32], index: 0, kind: input, shape index: {}]
  %s1 = inlined_call_operand.vmem [shape: bf16[2,128,32], index: 1, kind: input, shape index: {}]
  %s2 = inlined_call_operand.hbm [shape: f32[2,128,128], index: 2, kind: output, shape index: {}]
  %s3 = sld [smem:[#allocation0]]
  $region49: #{tpu_custom_call.1} parent=0
    _
  %s5 = ssub.s32 1, %s3
  %s6 = scalar_select 0, %s5, %s3
  $region1: #{tpu_custom_call.1} parent=0
    #allocation3 [shape = 'u8[131072]{0}', space=vmem, size = 0x20000, scoped, tag = 'output window, operand 0']
    #allocation4 [shape = 's32[2]{0}', space=sflag, size = 0x8, scoped, tag = 'scoped memory for tpu_custom_call.1']
    %7 = vsyncpa [#allocation4], 0
    %s8 = scalar_lea.sflag [#allocation4], 1
    %9 = vsyncpa %s8, 0
    loop: start=0, step=1, limit=4
    $region2: #{tpu_custom_call.1} parent=1 // loop_pre_header
      _
    $region3: #{tpu_custom_call.1} parent=1 // loop_header
      %s11 = sphi 0, %s15
      %p12 = scmp.ge.s32.totalorder %s11, 4
      %s18 = sphi 0, %s44
      %s19 = sphi 0, %s40
      %s20 = sphi 0, %s36
      %s21 = sphi 0, %s32
      %s22 = sphi 0, %s18
      %s23 = sphi 0, %s19
      %s24 = sphi 0, %s20
      %s25 = sphi 0, %s21
      %s26 = sphi 0, %s22
      %s27 = sphi 0, %s23
      %s28 = sphi 0, %s24
      %s29 = sphi 0, %s25
      %s51 = sphi 0, %s53
      %s54 = sphi 0, %s51
      %s55 = sphi 0, %s54
      %s71 = sphi 0, %s55
      %s81 = sphi 0, %s83
      %s84 = sphi 0, %s81
      %s85 = sphi 0, %s84
      %s101 = sphi 0, %s85
      %s111 = sphi 0, %s113
      %s114 = sphi 0, %s111
      %s115 = sphi 0, %s114
      %s131 = sphi 0, %s115
    $region4: #{tpu_custom_call.1} parent=1 // loop_header_branch
      %14 = sbr.rel (%p12) target = $region8
    $region5: #{tpu_custom_call.1} parent=1 // loop_body
      %s16 = ssub.s32 %s11, 1
      %s17 = ssub.s32 %s11, 2
      %s30 = sadd.s32 1, %s21
      %p31 = scmp.ge.s32.totalorder %s30, 1
      %s32 = scalar_select %p31, 0, %s30
      %s33 = sadd.s32 1, %s20
      %s34 = scalar_select %p31, %s33, %s20
      %p35 = scmp.ge.s32.totalorder %s34, 1
      %s36 = scalar_select %p35, 0, %s34
      %s37 = sadd.s32 1, %s19
      %s38 = scalar_select %p35, %s37, %s19
      %p39 = scmp.ge.s32.totalorder %s38, 2
      %s40 = scalar_select %p39, 0, %s38
      %s41 = sadd.s32 1, %s18
      %s42 = scalar_select %p39, %s41, %s18
      %p43 = scmp.ge.s32.totalorder %s42, 1
      %s44 = scalar_select %p43, 0, %s42
      %s45 = ssub.s32 %s19, %s40
      %s46 = ssub.s32 %s18, %s44
      %s47 = sor.u32 %s45, %s46
      %s48 = ssub.s32 %s21, %s32
      %s49 = sor.u32 %s47, %s48
      %p50 = scmp.eq.s32.totalorder %s49, 0
      %s52 = sadd.s32 %s51, 1
      %s53 = scalar_select %p50, %s51, %s52
      %p56 = pneg %p50
      %p57 = scmp.eq.s32.totalorder %s11, 1
      %p58 = por %p56, %p57
      %p59 = scmp.ne.s32.totalorder %s51, %s54
      %p60 = scmp.eq.s32.totalorder %s11, 0
      %p61 = por %p59, %p60
      %p62 = scmp.ne.s32.totalorder %s51, %s54
      %p63 = scmp.eq.s32.totalorder %s16, 1
      %p64 = por %p62, %p63
      %p65 = scmp.ne.s32.totalorder %s54, %s55
      %p66 = scmp.eq.s32.totalorder %s16, 0
      %p67 = por %p65, %p66
      %p68 = scmp.ne.s32.totalorder %s54, %s55
      %p69 = scmp.eq.s32.totalorder %s17, 1
      %p70 = por %p68, %p69
      %p72 = scmp.ne.s32.totalorder %s55, %s71
      %p73 = scmp.eq.s32.totalorder %s17, 0
      %p74 = por %p72, %p73
      %s75 = ssub.s32 %s19, %s40
      %s76 = ssub.s32 %s20, %s36
      %s77 = sor.u32 %s75, %s76
      %s78 = ssub.s32 %s21, %s32
      %s79 = sor.u32 %s77, %s78
      %p80 = scmp.eq.s32.totalorder %s79, 0
      %s82 = sadd.s32 %s81, 1
      %s83 = scalar_select %p80, %s81, %s82
      %p86 = pneg %p80
      %p87 = scmp.eq.s32.totalorder %s11, 1
      %p88 = por %p86, %p87
      %p89 = scmp.ne.s32.totalorder %s81, %s84
      %p90 = scmp.eq.s32.totalorder %s11, 0
      %p91 = por %p89, %p90
      %p92 = scmp.ne.s32.totalorder %s81, %s84
      %p93 = scmp.eq.s32.totalorder %s16, 1
      %p94 = por %p92, %p93
      %p95 = scmp.ne.s32.totalorder %s84, %s85
      %p96 = scmp.eq.s32.totalorder %s16, 0
      %p97 = por %p95, %p96
      %p98 = scmp.ne.s32.totalorder %s84, %s85
      %p99 = scmp.eq.s32.totalorder %s17, 1
      %p100 = por %p98, %p99
      %p102 = scmp.ne.s32.totalorder %s85, %s101
      %p103 = scmp.eq.s32.totalorder %s17, 0
      %p104 = por %p102, %p103
      %s105 = ssub.s32 %s19, %s40
      %s106 = ssub.s32 %s18, %s44
      %s107 = sor.u32 %s105, %s106
      %s108 = ssub.s32 %s20, %s36
      %s109 = sor.u32 %s107, %s108
      %p110 = scmp.eq.s32.totalorder %s109, 0
      %s112 = sadd.s32 %s111, 1
      %s113 = scalar_select %p110, %s111, %s112
      %p116 = pneg %p110
      %p117 = scmp.eq.s32.totalorder %s11, 1
      %p118 = por %p116, %p117
      %p119 = scmp.ne.s32.totalorder %s111, %s114
      %p120 = scmp.eq.s32.totalorder %s11, 0
      %p121 = por %p119, %p120
      %p122 = scmp.ne.s32.totalorder %s111, %s114
      %p123 = scmp.eq.s32.totalorder %s16, 1
      %p124 = por %p122, %p123
      %p125 = scmp.ne.s32.totalorder %s114, %s115
      %p126 = scmp.eq.s32.totalorder %s16, 0
      %p127 = por %p125, %p126
      %p128 = scmp.ne.s32.totalorder %s114, %s115
      %p129 = scmp.eq.s32.totalorder %s17, 1
      %p130 = por %p128, %p129
      %p132 = scmp.ne.s32.totalorder %s115, %s131
      %p133 = scmp.eq.s32.totalorder %s17, 0
      %p134 = por %p132, %p133
      %p135 = scmp.le.s32.totalorder 1, %s11
      %p136 = scmp.lt.s32.totalorder %s11, 3
      %p137 = pnand %p135, %p136
      %p138 = pneg %p137
      // Predicated region
      $region9: #{tpu_custom_call.1} parent=5 // pred_check
        _
      $region10: #{tpu_custom_call.1} parent=5 // pred_check_branch
        %140 = sbr.rel (%p137) target = $region12
      $region11: #{tpu_custom_call.1} parent=5 // pred_region
        %s141 = ssub.s32 %s11, 1
      $region12: #{tpu_custom_call.1} parent=5 // pred_fallthru
        _
      %p142 = scmp.lt.s32.totalorder %s11, 2
      // Predicated region
      $region13: #{tpu_custom_call.1} parent=5 // pred_check
        %p143 = pneg %p142
      $region14: #{tpu_custom_call.1} parent=5 // pred_check_branch
        %145 = sbr.rel (%p143) target = $region16
      $region15: #{tpu_custom_call.1} parent=5 // pred_region
        // Predicated region
        $region17: #{tpu_custom_call.1} parent=15 // pred_check
          %p146 = pneg %p61
        $region18: #{tpu_custom_call.1} parent=15 // pred_check_branch
          %148 = sbr.rel (%p146) target = $region20
        $region19: #{tpu_custom_call.1} parent=15 // pred_region
          %s149 = smul.u32 16, %s18
          %p150 = scmp.lt.s32.totalorder %s19, 1
          %s151 = scalar_select %p150, %s19, 1
          %p152 = scmp.lt.s32.totalorder %s149, 15
          %s153 = scalar_select %p152, %s149, 15
          %p154 = scmp.lt.s32.totalorder %s21, 0
          %s155 = scalar_select %p154, %s21, 0
          %s156 = sadd.s32 %s155, %s153
          %s157 = smul.addr %s151, 16
          %s158 = sadd.s32 %s156, %s157
          %s159 = smul.addr %s158, 4
          %s160 = scalar_lea.vmem %s0, %s159
          %s161 = smul.u32 16, %s18
        $region20: #{tpu_custom_call.1} parent=15 // pred_fallthru
          _
        // Predicated region
        $region21: #{tpu_custom_call.1} parent=15 // pred_check
          %p162 = pneg %p91
        $region22: #{tpu_custom_call.1} parent=15 // pred_check_branch
          %164 = sbr.rel (%p162) target = $region24
        $region23: #{tpu_custom_call.1} parent=15 // pred_region
          %s165 = smul.u32 16, %s20
          %p166 = scmp.lt.s32.totalorder %s19, 1
          %s167 = scalar_select %p166, %s19, 1
          %p168 = scmp.lt.s32.totalorder %s165, 15
          %s169 = scalar_select %p168, %s165, 15
          %p170 = scmp.lt.s32.totalorder %s21, 0
          %s171 = scalar_select %p170, %s21, 0
          %s172 = sadd.s32 %s171, %s169
          %s173 = smul.addr %s167, 16
          %s174 = sadd.s32 %s172, %s173
          %s175 = smul.addr %s174, 4
          %s176 = scalar_lea.vmem %s1, %s175
          %s177 = smul.u32 16, %s20
        $region24: #{tpu_custom_call.1} parent=15 // pred_fallthru
          _
      $region16: #{tpu_custom_call.1} parent=5 // pred_fallthru
        _
      %p178 = scmp.le.s32.totalorder 1, %s11
      %p179 = scmp.lt.s32.totalorder %s11, 3
      %p180 = pnand %p178, %p179
      %p181 = pneg %p180
      // Predicated region
      $region25: #{tpu_custom_call.1} parent=5 // pred_check
        _
      $region26: #{tpu_custom_call.1} parent=5 // pred_check_branch
        %183 = sbr.rel (%p180) target = $region28
      $region27: #{tpu_custom_call.1} parent=5 // pred_region
        %s184 = ssub.s32 %s11, 1
        %s185 = smul.u32 16, %s22
        %p186 = scmp.lt.s32.totalorder %s23, 1
        %s187 = scalar_select %p186, %s23, 1
        %p188 = scmp.lt.s32.totalorder %s185, 15
        %s189 = scalar_select %p188, %s185, 15
        %p190 = scmp.lt.s32.totalorder %s25, 0
        %s191 = scalar_select %p190, %s25, 0
        %s192 = sadd.s32 %s191, %s189
        %s193 = smul.addr %s187, 16
        %s194 = sadd.s32 %s192, %s193
        %s195 = smul.addr %s194, 4
        %s196 = scalar_lea.vmem %s0, %s195
        %p197 = pneg %p67
        %p198 = pneg %p64
        %s199 = smul.u32 16, %s24
        %p200 = scmp.lt.s32.totalorder %s23, 1
        %s201 = scalar_select %p200, %s23, 1
        %p202 = scmp.lt.s32.totalorder %s199, 15
        %s203 = scalar_select %p202, %s199, 15
        %p204 = scmp.lt.s32.totalorder %s25, 0
        %s205 = scalar_select %p204, %s25, 0
        %s206 = sadd.s32 %s205, %s203
        %s207 = smul.addr %s201, 16
        %s208 = sadd.s32 %s206, %s207
        %s209 = smul.addr %s208, 4
        %s210 = scalar_lea.vmem %s1, %s209
        %p211 = pneg %p97
        %p212 = pneg %p94
        %p213 = pneg %p127
        %p214 = pneg %p124
        %s215 = sand.u32 %s114, 1
        %s216 = scalar_lea.sflag [#allocation4], %s215
        %s217 = sand.u32 %s114, 1
        %s218 = smul.addr %s217, 128
        %s219 = scalar_lea.vmem [#allocation3], %s218
        %s220 = smul.u32 16, %s22
        %p221 = scmp.lt.s32.totalorder %s23, 1
        %s222 = scalar_select %p221, %s23, 1
        %p223 = scmp.lt.s32.totalorder %s220, 15
        %s224 = scalar_select %p223, %s220, 15
        %p225 = scmp.lt.s32.totalorder %s25, 0
        %s226 = scalar_select %p225, %s25, 0
        %s227 = sadd.s32 %s226, %s224
        %s228 = smul.addr %s222, 16
        %s229 = sadd.s32 %s227, %s228
        %s230 = smul.addr %s229, 4
        %s231 = scalar_lea.vmem %s0, %s230
        %s232 = smul.u32 16, %s22
        %s233 = smul.u32 16, %s24
        %p234 = scmp.lt.s32.totalorder %s23, 1
        %s235 = scalar_select %p234, %s23, 1
        %p236 = scmp.lt.s32.totalorder %s233, 15
        %s237 = scalar_select %p236, %s233, 15
        %p238 = scmp.lt.s32.totalorder %s25, 0
        %s239 = scalar_select %p238, %s25, 0
        %s240 = sadd.s32 %s239, %s237
        %s241 = smul.addr %s235, 16
        %s242 = sadd.s32 %s240, %s241
        %s243 = smul.addr %s242, 4
        %s244 = scalar_lea.vmem %s1, %s243
        %s245 = smul.u32 16, %s24
        %s246 = smul.u32 16, %s22
        %p248 = scmp.eq.s32.totalorder %s25, 0
        // Predicated region
        $region29: #{tpu_custom_call.1} parent=27 // pred_check
          %p249 = pneg %p248
        $region30: #{tpu_custom_call.1} parent=27 // pred_check_branch
          %251 = sbr.rel (%p249) target = $region32
        $region31: #{tpu_custom_call.1} parent=27 // pred_region
          %252 = vst [vmem:[#allocation2] sm:$0xff] 0.0
          %253 = vst [vmem:[#allocation2 + $0x8] sm:$0xff] 0.0
          %254 = vst [vmem:[#allocation2 + $0x10] sm:$0xff] 0.0
          %255 = vst [vmem:[#allocation2 + $0x18] sm:$0xff] 0.0
          %256 = vst [vmem:[#allocation2 + $0x20] sm:$0xff] 0.0
          %257 = vst [vmem:[#allocation2 + $0x28] sm:$0xff] 0.0
          %258 = vst [vmem:[#allocation2 + $0x30] sm:$0xff] 0.0
          %259 = vst [vmem:[#allocation2 + $0x38] sm:$0xff] 0.0
          %260 = vst [vmem:[#allocation2 + $0x40] sm:$0xff] 0.0
          %261 = vst [vmem:[#allocation2 + $0x48] sm:$0xff] 0.0
          %262 = vst [vmem:[#allocation2 + $0x50] sm:$0xff] 0.0
          %263 = vst [vmem:[#allocation2 + $0x58] sm:$0xff] 0.0
          %264 = vst [vmem:[#allocation2 + $0x60] sm:$0xff] 0.0
          %265 = vst [vmem:[#allocation2 + $0x68] sm:$0xff] 0.0
          %266 = vst [vmem:[#allocation2 + $0x70] sm:$0xff] 0.0
          %267 = vst [vmem:[#allocation2 + $0x78] sm:$0xff] 0.0
        $region32: #{tpu_custom_call.1} parent=27 // pred_fallthru
          _
        %v268 = vld [vmem:[#allocation2] sm:$0xff]
        %v269 = vld [vmem:[#allocation2 + $0x8] sm:$0xff]
        %v270 = vld [vmem:[#allocation2 + $0x10] sm:$0xff]
        %v271 = vld [vmem:[#allocation2 + $0x18] sm:$0xff]
        %v272 = vld [vmem:[#allocation2 + $0x20] sm:$0xff]
        %v273 = vld [vmem:[#allocation2 + $0x28] sm:$0xff]
        %v274 = vld [vmem:[#allocation2 + $0x30] sm:$0xff]
        %v275 = vld [vmem:[#allocation2 + $0x38] sm:$0xff]
        %v276 = vld [vmem:[#allocation2 + $0x40] sm:$0xff]
        %v277 = vld [vmem:[#allocation2 + $0x48] sm:$0xff]
        %v278 = vld [vmem:[#allocation2 + $0x50] sm:$0xff]
        %v279 = vld [vmem:[#allocation2 + $0x58] sm:$0xff]
        %v280 = vld [vmem:[#allocation2 + $0x60] sm:$0xff]
        %v281 = vld [vmem:[#allocation2 + $0x68] sm:$0xff]
        %v282 = vld [vmem:[#allocation2 + $0x70] sm:$0xff]
        %v283 = vld [vmem:[#allocation2 + $0x78] sm:$0xff]
        %v284 = vld [vmem:[%s231] sm:$0xf]
        %v285 = vld [vmem:[%s231 + $0x4] sm:$0xf]
        %v286 = vld [vmem:[%s231 + $0x8] sm:$0xf]
        %v287 = vld [vmem:[%s231 + $0xc] sm:$0xf]
        %v288 = vld [vmem:[%s231 + $0x10] sm:$0xf]
        %v289 = vld [vmem:[%s231 + $0x14] sm:$0xf]
        %v290 = vld [vmem:[%s231 + $0x18] sm:$0xf]
        %v291 = vld [vmem:[%s231 + $0x1c] sm:$0xf]
        %v292 = vld [vmem:[%s231 + $0x20] sm:$0xf]
        %v293 = vld [vmem:[%s231 + $0x24] sm:$0xf]
        %v294 = vld [vmem:[%s231 + $0x28] sm:$0xf]
        %v295 = vld [vmem:[%s231 + $0x2c] sm:$0xf]
        %v296 = vld [vmem:[%s231 + $0x30] sm:$0xf]
        %v297 = vld [vmem:[%s231 + $0x34] sm:$0xf]
        %v298 = vld [vmem:[%s231 + $0x38] sm:$0xf]
        %v299 = vld [vmem:[%s231 + $0x3c] sm:$0xf]
        %v300 = vld [vmem:[%s244] sm:$0xf]
        %v301 = vld [vmem:[%s244 + $0x4] sm:$0xf]
        %v302 = vld [vmem:[%s244 + $0x8] sm:$0xf]
        %v303 = vld [vmem:[%s244 + $0xc] sm:$0xf]
        %v304 = vld [vmem:[%s244 + $0x10] sm:$0xf]
        %v305 = vld [vmem:[%s244 + $0x14] sm:$0xf]
        %v306 = vld [vmem:[%s244 + $0x18] sm:$0xf]
        %v307 = vld [vmem:[%s244 + $0x1c] sm:$0xf]
        %v308 = vld [vmem:[%s244 + $0x20] sm:$0xf]
        %v309 = vld [vmem:[%s244 + $0x24] sm:$0xf]
        %v310 = vld [vmem:[%s244 + $0x28] sm:$0xf]
        %v311 = vld [vmem:[%s244 + $0x2c] sm:$0xf]
        %v312 = vld [vmem:[%s244 + $0x30] sm:$0xf]
        %v313 = vld [vmem:[%s244 + $0x34] sm:$0xf]
        %v314 = vld [vmem:[%s244 + $0x38] sm:$0xf]
        %v315 = vld [vmem:[%s244 + $0x3c] sm:$0xf]
        %v332 = vunpack.c.l.b16 %v284
        %v333 = vunpack.c.l.b16 %v285
        %v334 = vunpack.c.l.b16 %v286
        %v335 = vunpack.c.l.b16 %v287
        %v336 = vunpack.c.l.b16 %v288
        %v337 = vunpack.c.l.b16 %v289
        %v338 = vunpack.c.l.b16 %v290
        %v339 = vunpack.c.l.b16 %v291
        %v340 = vunpack.c.l.b16 %v292
        %v341 = vunpack.c.l.b16 %v293
        %v342 = vunpack.c.l.b16 %v294
        %v343 = vunpack.c.l.b16 %v295
        %v344 = vunpack.c.l.b16 %v296
        %v345 = vunpack.c.l.b16 %v297
        %v346 = vunpack.c.l.b16 %v298
        %v347 = vunpack.c.l.b16 %v299
        %v348 = vpack.c.b16 %v333, %v332
        %v349 = vpack.c.b16 %v335, %v334
        %v350 = vpack.c.b16 %v337, %v336
        %v351 = vpack.c.b16 %v339, %v338
        %v352 = vpack.c.b16 %v341, %v340
        %v353 = vpack.c.b16 %v343, %v342
        %v354 = vpack.c.b16 %v345, %v344
        %v355 = vpack.c.b16 %v347, %v346
        %v372 = vunpack.c.l.b16 %v300
        %v373 = vunpack.c.l.b16 %v301
        %v374 = vunpack.c.l.b16 %v302
        %v375 = vunpack.c.l.b16 %v303
        %v376 = vunpack.c.l.b16 %v304
        %v377 = vunpack.c.l.b16 %v305
        %v378 = vunpack.c.l.b16 %v306
        %v379 = vunpack.c.l.b16 %v307
        %v380 = vunpack.c.l.b16 %v308
        %v381 = vunpack.c.l.b16 %v309
        %v382 = vunpack.c.l.b16 %v310
        %v383 = vunpack.c.l.b16 %v311
        %v384 = vunpack.c.l.b16 %v312
        %v385 = vunpack.c.l.b16 %v313
        %v386 = vunpack.c.l.b16 %v314
        %v387 = vunpack.c.l.b16 %v315
        %v388 = vpack.c.b16 %v373, %v372
        %v389 = vpack.c.b16 %v375, %v374
        %v390 = vpack.c.b16 %v377, %v376
        %v391 = vpack.c.b16 %v379, %v378
        %v392 = vpack.c.b16 %v381, %v380
        %v393 = vpack.c.b16 %v383, %v382
        %v394 = vpack.c.b16 %v385, %v384
        %v395 = vpack.c.b16 %v387, %v386
        %vm396 = vcmask 261120
        %v398 = vsel %vm396, %v348, 0
        %v401 = vsel %vm396, %v349, 0
        %v404 = vsel %vm396, %v350, 0
        %v407 = vsel %vm396, %v351, 0
        %v410 = vsel %vm396, %v352, 0
        %v413 = vsel %vm396, %v353, 0
        %v416 = vsel %vm396, %v354, 0
        %v419 = vsel %vm396, %v355, 0
        %v422 = vsel %vm396, %v388, 0
        %v425 = vsel %vm396, %v389, 0
        %v428 = vsel %vm396, %v390, 0
        %v431 = vsel %vm396, %v391, 0
        %v434 = vsel %vm396, %v392, 0
        %v437 = vsel %vm396, %v393, 0
        %v440 = vsel %vm396, %v394, 0
        %v443 = vsel %vm396, %v395, 0
        %445 = vmatprep.subr.bf16.mxu0 0
        %446 = vmatpush1.bf16.xpose.msra.mxu0 %v422
        %447 = vmatprep.subr.bf16.mxu0 0
        %448 = vmatpush1.bf16.xpose.msra.mxu0 %v425
        %449 = vmatprep.subr.bf16.mxu0 0
        %450 = vmatpush1.bf16.xpose.msra.mxu0 %v428
        %451 = vmatprep.subr.bf16.mxu0 0
        %452 = vmatpush1.bf16.xpose.msra.mxu0 %v431
        %453 = vmatprep.subr.bf16.mxu0 0
        %454 = vmatpush1.bf16.xpose.msra.mxu0 %v434
        %455 = vmatprep.subr.bf16.mxu0 0
        %456 = vmatpush1.bf16.xpose.msra.mxu0 %v437
        %457 = vmatprep.subr.bf16.mxu0 0
        %458 = vmatpush1.bf16.xpose.msra.mxu0 %v440
        %459 = vmatprep.subr.bf16.mxu0 0
        %460 = vmatpush1.bf16.xpose.msra.mxu0 %v443
        %461 = vmatprep.subr.bf16.mxu0 0
        %462 = vmatpush1.bf16.xpose.msra.mxu0 0
        %463 = vmatprep.subr.bf16.mxu0 0
        %464 = vmatpush1.bf16.xpose.msra.mxu0 0
        %465 = vmatprep.subr.bf16.mxu0 0
        %466 = vmatpush1.bf16.xpose.msra.mxu0 0
        %467 = vmatprep.subr.bf16.mxu0 0
        %468 = vmatpush1.bf16.xpose.msra.mxu0 0
        %469 = vmatprep.subr.bf16.mxu0 0
        %470 = vmatpush1.bf16.xpose.msra.mxu0 0
        %471 = vmatprep.subr.bf16.mxu0 0
        %472 = vmatpush1.bf16.xpose.msra.mxu0 0
        %473 = vmatprep.subr.bf16.mxu0 0
        %474 = vmatpush1.bf16.xpose.msra.mxu0 0
        %475 = vmatprep.subr.bf16.mxu0 0
        %476 = vmatpush1.bf16.xpose.msra.mxu0 0
        %477 = vmatprep.mubr.bf16.mxu0 0
        %478 = vmatmul.mubr.bf16.gmra.mrb[0].mxu0 %v398
        %v479 = vpop.f32.mrb[0].mxu0
        %v480 = vadd.f32 0.0, %v479
        %v481 = vpop.f32.mrb[0].mxu0
        %v482 = vpop.f32.mrb[0].mxu0
        %v483 = vadd.f32 0.0, %v482
        %v484 = vpop.f32.mrb[0].mxu0
        %485 = vmatprep.mubr.bf16.mxu0 0
        %486 = vmatmul.mubr.bf16.gmra.mrb[0].mxu0 %v401
        %v487 = vpop.f32.mrb[0].mxu0
        %v488 = vadd.f32 0.0, %v487
        %v489 = vpop.f32.mrb[0].mxu0
        %v490 = vpop.f32.mrb[0].mxu0
        %v491 = vadd.f32 0.0, %v490
        %v492 = vpop.f32.mrb[0].mxu0
        %493 = vmatprep.mubr.bf16.mxu0 0
        %494 = vmatmul.mubr.bf16.gmra.mrb[0].mxu0 %v404
        %v495 = vpop.f32.mrb[0].mxu0
        %v496 = vadd.f32 0.0, %v495
        %v497 = vpop.f32.mrb[0].mxu0
        %v498 = vpop.f32.mrb[0].mxu0
        %v499 = vadd.f32 0.0, %v498
        %v500 = vpop.f32.mrb[0].mxu0
        %501 = vmatprep.mubr.bf16.mxu0 0
        %502 = vmatmul.mubr.bf16.gmra.mrb[0].mxu0 %v407
        %v503 = vpop.f32.mrb[0].mxu0
        %v504 = vadd.f32 0.0, %v503
        %v505 = vpop.f32.mrb[0].mxu0
        %v506 = vpop.f32.mrb[0].mxu0
        %v507 = vadd.f32 0.0, %v506
        %v508 = vpop.f32.mrb[0].mxu0
        %509 = vmatprep.mubr.bf16.mxu0 0
        %510 = vmatmul.mubr.bf16.gmra.mrb[0].mxu0 %v410
        %v511 = vpop.f32.mrb[0].mxu0
        %v512 = vadd.f32 0.0, %v511
        %v513 = vpop.f32.mrb[0].mxu0
        %v514 = vpop.f32.mrb[0].mxu0
        %v515 = vadd.f32 0.0, %v514
        %v516 = vpop.f32.mrb[0].mxu0
        %517 = vmatprep.mubr.bf16.mxu0 0
        %518 = vmatmul.mubr.bf16.gmra.mrb[0].mxu0 %v413
        %v519 = vpop.f32.mrb[0].mxu0
        %v520 = vadd.f32 0.0, %v519
        %v521 = vpop.f32.mrb[0].mxu0
        %v522 = vpop.f32.mrb[0].mxu0
        %v523 = vadd.f32 0.0, %v522
        %v524 = vpop.f32.mrb[0].mxu0
        %525 = vmatprep.mubr.bf16.mxu0 0
        %526 = vmatmul.mubr.bf16.gmra.mrb[0].mxu0 %v416
        %v527 = vpop.f32.mrb[0].mxu0
        %v528 = vadd.f32 0.0, %v527
        %v529 = vpop.f32.mrb[0].mxu0
        %v530 = vpop.f32.mrb[0].mxu0
        %v531 = vadd.f32 0.0, %v530
        %v532 = vpop.f32.mrb[0].mxu0
        %533 = vmatprep.mubr.bf16.mxu0 0
        %534 = vmatmul.mubr.bf16.gmra.mrb[0].mxu0 %v419
        %v535 = vpop.f32.mrb[0].mxu0
        %v536 = vadd.f32 0.0, %v535
        %v537 = vpop.f32.mrb[0].mxu0
        %v538 = vpop.f32.mrb[0].mxu0
        %v539 = vadd.f32 0.0, %v538
        %v540 = vpop.f32.mrb[0].mxu0
        %541 = vdwg.mxu0
        %v542 = vadd.f32 %v268, %v480
        %v543 = vadd.f32 %v269, %v483
        %v544 = vadd.f32 %v270, %v488
        %v545 = vadd.f32 %v271, %v491
        %v546 = vadd.f32 %v272, %v496
        %v547 = vadd.f32 %v273, %v499
        %v548 = vadd.f32 %v274, %v504
        %v549 = vadd.f32 %v275, %v507
        %v550 = vadd.f32 %v276, %v512
        %v551 = vadd.f32 %v277, %v515
        %v552 = vadd.f32 %v278, %v520
        %v553 = vadd.f32 %v279, %v523
        %v554 = vadd.f32 %v280, %v528
        %v555 = vadd.f32 %v281, %v531
        %v556 = vadd.f32 %v282, %v536
        %v557 = vadd.f32 %v283, %v539
        %558 = vst [vmem:[#allocation2] sm:$0xff] %v542
        %559 = vst [vmem:[#allocation2 + $0x8] sm:$0xff] %v543
        %560 = vst [vmem:[#allocation2 + $0x10] sm:$0xff] %v544
        %561 = vst [vmem:[#allocation2 + $0x18] sm:$0xff] %v545
        %562 = vst [vmem:[#allocation2 + $0x20] sm:$0xff] %v546
        %563 = vst [vmem:[#allocation2 + $0x28] sm:$0xff] %v547
        %564 = vst [vmem:[#allocation2 + $0x30] sm:$0xff] %v548
        %565 = vst [vmem:[#allocation2 + $0x38] sm:$0xff] %v549
        %566 = vst [vmem:[#allocation2 + $0x40] sm:$0xff] %v550
        %567 = vst [vmem:[#allocation2 + $0x48] sm:$0xff] %v551
        %568 = vst [vmem:[#allocation2 + $0x50] sm:$0xff] %v552
        %569 = vst [vmem:[#allocation2 + $0x58] sm:$0xff] %v553
        %570 = vst [vmem:[#allocation2 + $0x60] sm:$0xff] %v554
        %571 = vst [vmem:[#allocation2 + $0x68] sm:$0xff] %v555
        %572 = vst [vmem:[#allocation2 + $0x70] sm:$0xff] %v556
        %573 = vst [vmem:[#allocation2 + $0x78] sm:$0xff] %v557
        // Predicated region
        $region33: #{tpu_custom_call.1} parent=27 // pred_check
          %p574 = pneg %p248
        $region34: #{tpu_custom_call.1} parent=27 // pred_check_branch
          %576 = sbr.rel (%p574) target = $region36
        $region35: #{tpu_custom_call.1} parent=27 // pred_region
          %v577 = vld [vmem:[#allocation2] sm:$0xff]
          %v578 = vld [vmem:[#allocation2 + $0x8] sm:$0xff]
          %v579 = vld [vmem:[#allocation2 + $0x10] sm:$0xff]
          %v580 = vld [vmem:[#allocation2 + $0x18] sm:$0xff]
          %v581 = vld [vmem:[#allocation2 + $0x20] sm:$0xff]
          %v582 = vld [vmem:[#allocation2 + $0x28] sm:$0xff]
          %v583 = vld [vmem:[#allocation2 + $0x30] sm:$0xff]
          %v584 = vld [vmem:[#allocation2 + $0x38] sm:$0xff]
          %v585 = vld [vmem:[#allocation2 + $0x40] sm:$0xff]
          %v586 = vld [vmem:[#allocation2 + $0x48] sm:$0xff]
          %v587 = vld [vmem:[#allocation2 + $0x50] sm:$0xff]
          %v588 = vld [vmem:[#allocation2 + $0x58] sm:$0xff]
          %v589 = vld [vmem:[#allocation2 + $0x60] sm:$0xff]
          %v590 = vld [vmem:[#allocation2 + $0x68] sm:$0xff]
          %v591 = vld [vmem:[#allocation2 + $0x70] sm:$0xff]
          %v592 = vld [vmem:[#allocation2 + $0x78] sm:$0xff]
          %v593 = vmul.f32 %v577, 0.5
          %v594 = vmul.f32 %v578, 0.5
          %v595 = vmul.f32 %v579, 0.5
          %v596 = vmul.f32 %v580, 0.5
          %v597 = vmul.f32 %v581, 0.5
          %v598 = vmul.f32 %v582, 0.5
          %v599 = vmul.f32 %v583, 0.5
          %v600 = vmul.f32 %v584, 0.5
          %v601 = vmul.f32 %v585, 0.5
          %v602 = vmul.f32 %v586, 0.5
          %v603 = vmul.f32 %v587, 0.5
          %v604 = vmul.f32 %v588, 0.5
          %v605 = vmul.f32 %v589, 0.5
          %v606 = vmul.f32 %v590, 0.5
          %v607 = vmul.f32 %v591, 0.5
          %v608 = vmul.f32 %v592, 0.5
          %v609 = vtanh.pop %v593
          %v610 = vtanh.pop %v594
          %v611 = vtanh.pop %v595
          %v612 = vtanh.pop %v596
          %v613 = vtanh.pop %v597
          %v614 = vtanh.pop %v598
          %v615 = vtanh.pop %v599
          %v616 = vtanh.pop %v600
          %v617 = vtanh.pop %v601
          %v618 = vtanh.pop %v602
          %v619 = vtanh.pop %v603
          %v620 = vtanh.pop %v604
          %v621 = vtanh.pop %v605
          %v622 = vtanh.pop %v606
          %v623 = vtanh.pop %v607
          %v624 = vtanh.pop %v608
          %v625 = vmul.f32 %v609, 0.5
          %v626 = vmul.f32 %v610, 0.5
          %v627 = vmul.f32 %v611, 0.5
          %v628 = vmul.f32 %v612, 0.5
          %v629 = vmul.f32 %v613, 0.5
          %v630 = vmul.f32 %v614, 0.5
          %v631 = vmul.f32 %v615, 0.5
          %v632 = vmul.f32 %v616, 0.5
          %v633 = vmul.f32 %v617, 0.5
          %v634 = vmul.f32 %v618, 0.5
          %v635 = vmul.f32 %v619, 0.5
          %v636 = vmul.f32 %v620, 0.5
          %v637 = vmul.f32 %v621, 0.5
          %v638 = vmul.f32 %v622, 0.5
          %v639 = vmul.f32 %v623, 0.5
          %v640 = vmul.f32 %v624, 0.5
          %v641 = vadd.f32 %v625, 0.5
          %v642 = vadd.f32 %v626, 0.5
          %v643 = vadd.f32 %v627, 0.5
          %v644 = vadd.f32 %v628, 0.5
          %v645 = vadd.f32 %v629, 0.5
          %v646 = vadd.f32 %v630, 0.5
          %v647 = vadd.f32 %v631, 0.5
          %v648 = vadd.f32 %v632, 0.5
          %v649 = vadd.f32 %v633, 0.5
          %v650 = vadd.f32 %v634, 0.5
          %v651 = vadd.f32 %v635, 0.5
          %v652 = vadd.f32 %v636, 0.5
          %v653 = vadd.f32 %v637, 0.5
          %v654 = vadd.f32 %v638, 0.5
          %v655 = vadd.f32 %v639, 0.5
          %v656 = vadd.f32 %v640, 0.5
          %657 = vst [vmem:[%s219] sm:$0xff] %v641
          %658 = vst [vmem:[%s219 + $0x8] sm:$0xff] %v642
          %659 = vst [vmem:[%s219 + $0x10] sm:$0xff] %v643
          %660 = vst [vmem:[%s219 + $0x18] sm:$0xff] %v644
          %661 = vst [vmem:[%s219 + $0x20] sm:$0xff] %v645
          %662 = vst [vmem:[%s219 + $0x28] sm:$0xff] %v646
          %663 = vst [vmem:[%s219 + $0x30] sm:$0xff] %v647
          %664 = vst [vmem:[%s219 + $0x38] sm:$0xff] %v648
          %665 = vst [vmem:[%s219 + $0x40] sm:$0xff] %v649
          %666 = vst [vmem:[%s219 + $0x48] sm:$0xff] %v650
          %667 = vst [vmem:[%s219 + $0x50] sm:$0xff] %v651
          %668 = vst [vmem:[%s219 + $0x58] sm:$0xff] %v652
          %669 = vst [vmem:[%s219 + $0x60] sm:$0xff] %v653
          %670 = vst [vmem:[%s219 + $0x68] sm:$0xff] %v654
          %671 = vst [vmem:[%s219 + $0x70] sm:$0xff] %v655
          %672 = vst [vmem:[%s219 + $0x78] sm:$0xff] %v656
        $region36: #{tpu_custom_call.1} parent=27 // pred_fallthru
          _
        %s673 = sand.u32 %s114, 1
        %s674 = scalar_lea.sflag [#allocation4], %s673
        %s675 = sand.u32 %s114, 1
        %s676 = smul.addr %s675, 128
        %s677 = scalar_lea.vmem [#allocation3], %s676
        // Predicated region
        $region37: #{tpu_custom_call.1} parent=27 // pred_check
          %p678 = pneg %p124
        $region38: #{tpu_custom_call.1} parent=27 // pred_check_branch
          %680 = sbr.rel (%p678) target = $region40
        $region39: #{tpu_custom_call.1} parent=27 // pred_region
          %s681 = smul.u32 16, %s22
          %s683 = ssub.s32 2048, 2048
          %684 = vsyncadd %s674, %s683
          %s685 = sadd.s32 %s24, %s681
          %s686 = smul.addr %s23, 16
          %s687 = sadd.s32 %s685, %s686
          %s688 = smul.addr %s687, 128
          %s689 = scalar_lea.hbm %s2, %s688
          %s690 = sshll.u32 %s677, 4
          %s691 = int_to_ptr.vmem [resolvable:$true] %s690
          %696 = dma.vmem_to_hbm [thread:$0]  %s691, 2048, %s689, %s674, 128, 128, 8
        $region40: #{tpu_custom_call.1} parent=27 // pred_fallthru
          _
      $region28: #{tpu_custom_call.1} parent=5 // pred_fallthru
        _
      %p697 = scmp.le.s32.totalorder 2, %s11
      // Predicated region
      $region41: #{tpu_custom_call.1} parent=5 // pred_check
        %p698 = pneg %p697
      $region42: #{tpu_custom_call.1} parent=5 // pred_check_branch
        %700 = sbr.rel (%p698) target = $region44
      $region43: #{tpu_custom_call.1} parent=5 // pred_region
        %s701 = ssub.s32 %s11, 2
        // Predicated region
        $region45: #{tpu_custom_call.1} parent=43 // pred_check
          %p702 = pneg %p130
        $region46: #{tpu_custom_call.1} parent=43 // pred_check_branch
          %704 = sbr.rel (%p702) target = $region48
        $region47: #{tpu_custom_call.1} parent=43 // pred_region
          %s705 = sand.u32 %s115, 1
          %s706 = scalar_lea.sflag [#allocation4], %s705
          %s707 = sand.u32 %s115, 1
          %s708 = smul.addr %s707, 128
          %s709 = scalar_lea.vmem [#allocation3], %s708
          %710 = dma.done %s706, 2048
        $region48: #{tpu_custom_call.1} parent=43 // pred_fallthru
          _
      $region44: #{tpu_custom_call.1} parent=5 // pred_fallthru
        _
    $region6: #{tpu_custom_call.1} parent=1 // loop_footer
      %s15 = sadd.s32 1, %s11
    $region7: #{tpu_custom_call.1} parent=1 // loop_footer_branch
      %10 = sbr.rel target = $region3
    $region8: #{tpu_custom_call.1} parent=1 // loop_exit
      _
    %711 = vsyncpa [#allocation4], 1
    %s712 = scalar_lea.sflag [#allocation4], 1
    %713 = vsyncpa %s712, 1

</llo_original>
